<compile_context>
chip_gen: v7x
topology: tpu7x:2x2x1
jax: 0.10.0
libtpu: 0.0.40
codegen_flags: <defaults>
</compile_context>

<pallas_src>
import functools
import math

import jax
import jax.numpy as jnp
from jax import lax
from jax.experimental import pallas as pl
from jax.experimental.pallas import tpu as pltpu


def _round_up(x, m):
    return ((x + m - 1) // m) * m


def _sublane_pack(itemsize):
    # f32 -> 8, bf16 -> 16, int8/fp8 -> 32 sublanes per (., 128) VMEM tile.
    return max(8, 32 // int(itemsize))


def _vmem_budget_bytes():
    """Generation-aware (tile budget, vmem_limit) in bytes."""
    try:
        cap = pltpu.get_tpu_info().vmem_capacity_bytes
    except Exception:  # interpret mode / older runtime: assume the smallest (v7x)
        cap = 64 * 1024 * 1024
    if cap >= 100 * 1024 * 1024:                 # v5e / v6e: 128 MiB physical
        return 80 * 1024 * 1024, 96 * 1024 * 1024
    # v7x (64 MiB physical) or unknown: keep >= 16 MiB headroom for the compiler.
    return (min(40 * 1024 * 1024, (cap * 5) // 8),
            min(48 * 1024 * 1024, (cap * 3) // 4))


def _maybe_repack_rows(arrs):
    """Row-major reshape (D, T) -> (D*k, T//k) so the row count is a multiple of
    the widest sublane packing among the input dtypes (16 for bf16, 32 for int8).

    A small D with a narrow dtype otherwise streams half-empty (16,128)/(32,128)
    tiles, wasting HBM bandwidth and VMEM.  The reduction is layout-agnostic, so
    any reshape applied consistently to all three inputs preserves the result.
    """
    D, T = arrs[0].shape
    target = max(_sublane_pack(a.dtype.itemsize) for a in arrs)
    if D % target == 0:
        return arrs, D, T
    k = target // math.gcd(D, target)
    if k <= 1 or T % k != 0 or (T // k) < 128:
        return arrs, D, T            # cannot repack cheaply; keep original layout
    R, C = D * k, T // k
    return tuple(a.reshape(R, C) for a in arrs), R, C


def _poisson_ell_kernel(mu_ref, cov_ref, y_ref, out_ref, acc_ref, *,
                        neg_dtstep, n_blocks, tiles_per_par, tile_t, chunk_w,
                        total_cols, has_phantom, needs_tail_mask):
    """One (rows, tile_t) time tile per grid step.

    The tile is processed in chunk_w-wide lane chunks so every intermediate
    stays in vregs (no full-tile VMEM temporaries); the running partial is
    folded into the small (rows, chunk_w) accumulator with a single VMEM RMW
    per step.  The cross-lane/sublane reduce happens once per parallel chunk.
    """
    p = pl.program_id(0)          # parallel split of the column axis (dual-TC on v7x)
    t = pl.program_id(1)          # sequential reduction within the split
    g = p * tiles_per_par + t     # global tile index

    @pl.when(t == 0)
    def _init():
        acc_ref[...] = jnp.zeros_like(acc_ref)

    nb = tile_t // chunk_w        # static chunk count

    def chunk(start, masked):
        mu = mu_ref[:, pl.ds(start, chunk_w)].astype(jnp.float32)
        cov = cov_ref[:, pl.ds(start, chunk_w)].astype(jnp.float32)
        y = y_ref[:, pl.ds(start, chunk_w)].astype(jnp.float32)
        # -dtstep*exp(mu + 0.5*cov) + y*mu, minus sign folded into the constant.
        c = y * mu + neg_dtstep * jnp.exp(mu + 0.5 * cov)
        if masked:  # static: only traced for the single ragged tail-tile path
            cols = g * tile_t + start + lax.broadcasted_iota(jnp.int32, c.shape, 1)
            c = jnp.where(cols < total_cols, c, 0.0)
        return c

    def accumulate(masked):
        zero = jnp.zeros(acc_ref.shape, jnp.float32)
        if nb <= 8:                                 # short: fully unrolled, static offsets
            folded = zero
            for j in range(nb):
                folded = folded + chunk(j * chunk_w, masked)
        else:                                       # long: rolled loop, carry in vregs
            def body(j, folded):
                start = pl.multiple_of(j * chunk_w, chunk_w)
                return folded + chunk(start, masked)
            folded = lax.fori_loop(0, nb, body, zero)
        acc_ref[...] += folded                      # one small VMEM RMW per grid step

    if needs_tail_mask:
        # Lean path for every full tile; mask ops only on the single ragged tile.
        @pl.when(g < n_blocks - 1)
        def _lean():
            accumulate(False)

        @pl.when(g == n_blocks - 1)
        def _tail():
            accumulate(True)
    elif has_phantom:
        # Odd tile count split over 2 cores: skip the duplicated phantom tile.
        @pl.when(g < n_blocks)
        def _valid():
            accumulate(False)
    else:
        accumulate(False)

    @pl.when(t == tiles_per_par - 1)
    def _finalize():
        out_ref[...] = jnp.reshape(jnp.sum(acc_ref[...]), (1, 1, 1))


def poisson_expected_loglik(mu, cov, ybin, *, dtstep=0.001, tile_t=None,
                            vmem_tile_budget_bytes=None):
    """ell = -sum(dtstep * exp(mu + 0.5*cov)) + sum(ybin * mu), as an f32 scalar."""
    D, T = mu.shape
    assert cov.shape == (D, T) and ybin.shape == (D, T)

    # --- normalize layout: dense sublane packing for narrow dtypes ------------
    (mu, cov, ybin), R, C = _maybe_repack_rows((mu, cov, ybin))

    # --- generation-aware VMEM budget & time-tile sizing ----------------------
    budget, vmem_limit = _vmem_budget_bytes()
    if vmem_tile_budget_bytes is not None:
        budget = vmem_tile_budget_bytes

    # Double-buffered input tiles; rows padded to each dtype's sublane packing.
    bytes_per_col = 2 * sum(
        _round_up(R, _sublane_pack(a.dtype.itemsize)) * a.dtype.itemsize
        for a in (mu, cov, ybin))
    acc_bytes = _round_up(R, 8) * 512 * 4
    margin = 2 * 1024 * 1024                       # compiler-internal scratch
    if bytes_per_col * 128 + acc_bytes + margin > vmem_limit:
        # TODO(synk): add row (neuron-axis) tiling for very large D.
        raise ValueError(f"row count {R} too large for a (rows, 128) VMEM tile; "
                         "row tiling not implemented")
    avail = budget - acc_bytes - margin

    if tile_t is None:
        if C <= 128:
            tile_t = C                               # full-extent block: always legal
        else:
            max_cols = max(128, avail // bytes_per_col)
            tile_t = min(max_cols, _round_up(C, 128))  # never bigger than needed
            if tile_t >= 512:
                tile_t = (tile_t // 512) * 512         # keep a 512-wide chunk loop
            else:
                tile_t = _round_up(tile_t, 128)
    assert tile_t == C or tile_t % 128 == 0, "tile_t must be a multiple of 128"

    # Lane-chunk width processed per inner-loop step (intermediates stay in vregs).
    chunk_w = tile_t
    for cw in (512, 256, 128):
        if tile_t % cw == 0:
            chunk_w = cw
            break

    n_blocks = (C + tile_t - 1) // tile_t
    needs_tail_mask = (C % tile_t) != 0

    # Split the tile loop over TensorCores whenever there is >1 tile (2 TCs on
    # v7x; a harmless extra grid axis on single-TC v5e/v6e).
    n_par = 2 if n_blocks >= 2 else 1
    tiles_per_par = (n_blocks + n_par - 1) // n_par
    has_phantom = n_par * tiles_per_par != n_blocks

    kernel = functools.partial(
        _poisson_ell_kernel,
        neg_dtstep=-float(dtstep),        # Python float -> baked-in constant
        n_blocks=n_blocks,
        tiles_per_par=tiles_per_par,
        tile_t=tile_t,
        chunk_w=chunk_w,
        total_cols=C,
        has_phantom=has_phantom,
        needs_tail_mask=needs_tail_mask,
    )

    if has_phantom:
        def col_index(p_, t_):
            return (0, jnp.minimum(p_ * tiles_per_par + t_, n_blocks - 1))
    else:
        def col_index(p_, t_):
            return (0, p_ * tiles_per_par + t_)

    in_spec = pl.BlockSpec((R, tile_t), col_index)

    n_elem = R * C
    cost = pl.CostEstimate(
        flops=6 * n_elem,
        transcendentals=n_elem,
        bytes_accessed=int(mu.nbytes + cov.nbytes + ybin.nbytes + 4 * n_par))

    partials = pl.pallas_call(
        kernel,
        out_shape=jax.ShapeDtypeStruct((n_par, 1, 1), jnp.float32),
        grid_spec=pltpu.PrefetchScalarGridSpec(
            num_scalar_prefetch=0,
            grid=(n_par, tiles_per_par),
            in_specs=[in_spec, in_spec, in_spec],
            out_specs=pl.BlockSpec((1, 1, 1), lambda p_, t_: (p_, 0, 0)),
            scratch_shapes=[pltpu.VMEM((R, chunk_w), jnp.float32)],
        ),
        compiler_params=pltpu.CompilerParams(
            dimension_semantics=("parallel", "arbitrary"),
            vmem_limit_bytes=vmem_limit,
        ),
        cost_estimate=cost,
    )(mu, cov, ybin)

    return jnp.sum(partials)


def _reference_ell(mu, cov, ybin, dtstep=0.001):
    mu = mu.astype(jnp.float32)
    cov = cov.astype(jnp.float32)
    ybin = ybin.astype(jnp.float32)
    intval = dtstep * jnp.exp(mu + 0.5 * cov)
    return -jnp.sum(intval) + jnp.sum(ybin * mu)


def _check(name, got, want, rtol=1e-4, atol=1e-3):
    assert jnp.allclose(got, want, rtol=rtol, atol=atol), (name, got, want)


if __name__ == "__main__":
    dtstep = 0.001

    # Case 1: D=8, T=256, bf16 mu/cov (repacked to dense (16, 128) tiles inside
    # the wrapper), ybin kept in f32 (counts are only exact up to 256 in bf16).
    D, T = 8, 256
    k_mu, k_cov, k_y = jax.random.split(jax.random.PRNGKey(0), 3)
    mu = (0.5 * jax.random.normal(k_mu, (D, T), dtype=jnp.float32)).astype(jnp.bfloat16)
    cov = (0.1 + 0.2 * jax.nn.softplus(
        jax.random.normal(k_cov, (D, T), dtype=jnp.float32))).astype(jnp.bfloat16)
    ybin = jax.random.poisson(k_y, lam=0.05, shape=(D, T)).astype(jnp.float32)
    ell = jax.block_until_ready(poisson_expected_loglik(mu, cov, ybin, dtstep=dtstep))
    _check("case1", ell, _reference_ell(mu, cov, ybin, dtstep=dtstep))

    # Case 2: multi-tile reduction + dual-TC split (even tile count), f32 inputs.
    D2, T2 = 8, 512
    k_mu2, k_cov2, k_y2 = jax.random.split(jax.random.PRNGKey(1), 3)
    mu2 = 0.5 * jax.random.normal(k_mu2, (D2, T2), dtype=jnp.float32)
    cov2 = 0.1 + 0.2 * jax.nn.softplus(jax.random.normal(k_cov2, (D2, T2), dtype=jnp.float32))
    ybin2 = jax.random.poisson(k_y2, lam=0.05, shape=(D2, T2)).astype(jnp.float32)
    ell2 = jax.block_until_ready(
        poisson_expected_loglik(mu2, cov2, ybin2, dtstep=dtstep, tile_t=128))
    _check("case2", ell2, _reference_ell(mu2, cov2, ybin2, dtstep=dtstep))

    # Case 3: T not a multiple of the tile -> masked tail tile only.
    D3, T3 = 8, 200
    k_mu3, k_cov3, k_y3 = jax.random.split(jax.random.PRNGKey(2), 3)
    mu3 = 0.5 * jax.random.normal(k_mu3, (D3, T3), dtype=jnp.float32)
    cov3 = 0.1 + 0.2 * jax.nn.softplus(jax.random.normal(k_cov3, (D3, T3), dtype=jnp.float32))
    ybin3 = jax.random.poisson(k_y3, lam=0.05, shape=(D3, T3)).astype(jnp.float32)
    ell3 = jax.block_until_ready(
        poisson_expected_loglik(mu3, cov3, ybin3, dtstep=dtstep, tile_t=128))
    _check("case3", ell3, _reference_ell(mu3, cov3, ybin3, dtstep=dtstep))

    # Case 4: odd tile count -> robust dual-TC split with a skipped phantom tile.
    D4, T4 = 8, 300
    k_mu4, k_cov4, k_y4 = jax.random.split(jax.random.PRNGKey(3), 3)
    mu4 = 0.5 * jax.random.normal(k_mu4, (D4, T4), dtype=jnp.float32)
    cov4 = 0.1 + 0.2 * jax.nn.softplus(jax.random.normal(k_cov4, (D4, T4), dtype=jnp.float32))
    ybin4 = jax.random.poisson(k_y4, lam=0.05, shape=(D4, T4)).astype(jnp.float32)
    ell4 = jax.block_until_ready(
        poisson_expected_loglik(mu4, cov4, ybin4, dtstep=dtstep, tile_t=128))
    _check("case4", ell4, _reference_ell(mu4, cov4, ybin4, dtstep=dtstep))

    # Case 5: auto (budget-sized) tile + rolled in-kernel chunk loop + tail mask.
    D5, T5 = 8, 16484
    k_mu5, k_cov5, k_y5 = jax.random.split(jax.random.PRNGKey(4), 3)
    mu5 = 0.5 * jax.random.normal(k_mu5, (D5, T5), dtype=jnp.float32)
    cov5 = 0.1 + 0.2 * jax.nn.softplus(jax.random.normal(k_cov5, (D5, T5), dtype=jnp.float32))
    ybin5 = jax.random.poisson(k_y5, lam=0.05, shape=(D5, T5)).astype(jnp.float32)
    ell5 = jax.block_until_ready(poisson_expected_loglik(mu5, cov5, ybin5, dtstep=dtstep))
    _check("case5", ell5, _reference_ell(mu5, cov5, ybin5, dtstep=dtstep))

    print("KERNEL_OK")
</pallas_src>

<mosaic_0001>
module attributes {stable_mosaic.version = 11 : i64} {
  func.func @_poisson_ell_kernel(%arg0: i32, %arg1: i32, %arg2: memref<16x128xbf16, #tpu.memory_space<vmem>>, %arg3: memref<16x128xbf16, #tpu.memory_space<vmem>>, %arg4: memref<16x128xf32, #tpu.memory_space<vmem>>, %arg5: memref<1x1x1xf32, #tpu.memory_space<vmem>>, %arg6: memref<16x128xf32, #tpu.memory_space<vmem>>) attributes {dimension_semantics = [#tpu.dimension_semantics<parallel>, #tpu.dimension_semantics<arbitrary>], iteration_bounds = array<i64: 1, 1>, scalar_prefetch = 0 : i64, scratch_operands = 1 : i64, tpu.core_type = #tpu.core_type<tc>, window_params = [{transform_indices = @transform_0, window_bounds = array<i64: 16, 128>}, {transform_indices = @transform_1, window_bounds = array<i64: 16, 128>}, {transform_indices = @transform_2, window_bounds = array<i64: 16, 128>}, {transform_indices = @transform_3, window_bounds = array<i64: 1, 1, 1>}]} {
    %c0_i32 = arith.constant 0 : i32
    %0 = arith.cmpi eq, %arg1, %c0_i32 : i32
    %1 = arith.extui %0 : i1 to i32
    %c0_i32_0 = arith.constant 0 : i32
    %2 = arith.cmpi ne, %1, %c0_i32_0 : i32
    scf.if %2 {
      %cst_14 = arith.constant 0.000000e+00 : f32
      %24 = vector.broadcast %cst_14 : f32 to vector<16x128xf32>
      %c0_15 = arith.constant 0 : index
      %c0_16 = arith.constant 0 : index
      %25 = vector.load %arg6[%c0_15, %c0_16] : memref<16x128xf32, #tpu.memory_space<vmem>>, vector<16x128xf32>
      tpu.vector_store %arg6[%c0_15, %c0_16], %24 {strides = array<i32>} : memref<16x128xf32, #tpu.memory_space<vmem>>, vector<16x128xf32>,
    } else {
    }
    %cst = arith.constant 0.000000e+00 : f32
    %3 = vector.broadcast %cst : f32 to vector<16x128xf32>
    %c0 = arith.constant 0 : index
    %c0_1 = arith.constant 0 : index
    %4 = vector.load %arg2[%c0, %c0_1] : memref<16x128xbf16, #tpu.memory_space<vmem>>, vector<16x128xbf16>
    %5 = arith.extf %4 : vector<16x128xbf16> to vector<16x128xf32>
    %c0_2 = arith.constant 0 : index
    %c0_3 = arith.constant 0 : index
    %6 = vector.load %arg3[%c0_2, %c0_3] : memref<16x128xbf16, #tpu.memory_space<vmem>>, vector<16x128xbf16>
    %7 = arith.extf %6 : vector<16x128xbf16> to vector<16x128xf32>
    %c0_4 = arith.constant 0 : index
    %c0_5 = arith.constant 0 : index
    %8 = vector.load %arg4[%c0_4, %c0_5] : memref<16x128xf32, #tpu.memory_space<vmem>>, vector<16x128xf32>
    %9 = arith.mulf %8, %5 : vector<16x128xf32>
    %cst_6 = arith.constant 5.000000e-01 : f32
    %10 = vector.broadcast %cst_6 : f32 to vector<16x128xf32>
    %11 = arith.mulf %10, %7 : vector<16x128xf32>
    %12 = arith.addf %5, %11 : vector<16x128xf32>
    %13 = math.exp %12 : vector<16x128xf32>
    %cst_7 = arith.constant -1.000000e-03 : f32
    %14 = vector.broadcast %cst_7 : f32 to vector<16x128xf32>
    %15 = arith.mulf %14, %13 : vector<16x128xf32>
    %16 = arith.addf %9, %15 : vector<16x128xf32>
    %17 = arith.addf %3, %16 : vector<16x128xf32>
    %c0_8 = arith.constant 0 : index
    %c0_9 = arith.constant 0 : index
    %18 = vector.load %arg6[%c0_8, %c0_9] : memref<16x128xf32, #tpu.memory_space<vmem>>, vector<16x128xf32>
    %19 = arith.addf %18, %17 : vector<16x128xf32>
    %c0_10 = arith.constant 0 : index
    %c0_11 = arith.constant 0 : index
    %20 = vector.load %arg6[%c0_10, %c0_11] : memref<16x128xf32, #tpu.memory_space<vmem>>, vector<16x128xf32>
    tpu.vector_store %arg6[%c0_10, %c0_11], %19 {strides = array<i32>} : memref<16x128xf32, #tpu.memory_space<vmem>>, vector<16x128xf32>,
    %c0_i32_12 = arith.constant 0 : i32
    %21 = arith.cmpi eq, %arg1, %c0_i32_12 : i32
    %22 = arith.extui %21 : i1 to i32
    %c0_i32_13 = arith.constant 0 : i32
    %23 = arith.cmpi ne, %22, %c0_i32_13 : i32
    scf.if %23 {
      %c0_14 = arith.constant 0 : index
      %c0_15 = arith.constant 0 : index
      %24 = vector.load %arg6[%c0_14, %c0_15] : memref<16x128xf32, #tpu.memory_space<vmem>>, vector<16x128xf32>
      %25 = vector.shape_cast %24 : vector<16x128xf32> to vector<1x16x128xf32>
      %cst_16 = arith.constant dense<0.000000e+00> : vector<1xf32>
      %26 = vector.multi_reduction <add>, %25, %cst_16 [1, 2] : vector<1x16x128xf32> to vector<1xf32>
      %27 = vector.shape_cast %26 : vector<1xf32> to vector<1x1x1xf32>
      %28 = vector.extract %27[0, 0, 0] : f32 from vector<1x1x1xf32>
      %29 = vector.broadcast %28 : f32 to vector<1x1x1xf32>
      %c0_17 = arith.constant 0 : index
      %c0_18 = arith.constant 0 : index
      %c0_19 = arith.constant 0 : index
      %30 = vector.load %arg5[%c0_17, %c0_18, %c0_19] : memref<1x1x1xf32, #tpu.memory_space<vmem>>, vector<1x1x1xf32>
      tpu.vector_store %arg5[%c0_17, %c0_18, %c0_19], %29 {strides = array<i32>} : memref<1x1x1xf32, #tpu.memory_space<vmem>>, vector<1x1x1xf32>,
    } else {
    }
    return
  }
  func.func @transform_0(%arg0: i32, %arg1: i32) -> (i32, i32) {
    %c1_i32 = arith.constant 1 : i32
    %0 = arith.muli %arg0, %c1_i32 : i32
    %1 = arith.addi %0, %arg1 : i32
    %c0_i32 = arith.constant 0 : i32
    %c0_i32_0 = arith.constant 0 : i32
    return %c0_i32, %1 : i32, i32
  }
  func.func @transform_1(%arg0: i32, %arg1: i32) -> (i32, i32) {
    %c1_i32 = arith.constant 1 : i32
    %0 = arith.muli %arg0, %c1_i32 : i32
    %1 = arith.addi %0, %arg1 : i32
    %c0_i32 = arith.constant 0 : i32
    %c0_i32_0 = arith.constant 0 : i32
    return %c0_i32, %1 : i32, i32
  }
  func.func @transform_2(%arg0: i32, %arg1: i32) -> (i32, i32) {
    %c1_i32 = arith.constant 1 : i32
    %0 = arith.muli %arg0, %c1_i32 : i32
    %1 = arith.addi %0, %arg1 : i32
    %c0_i32 = arith.constant 0 : i32
    %c0_i32_0 = arith.constant 0 : i32
    return %c0_i32, %1 : i32, i32
  }
  func.func @transform_3(%arg0: i32, %arg1: i32) -> (i32, i32, i32) {
    %c0_i32 = arith.constant 0 : i32
    %c0_i32_0 = arith.constant 0 : i32
    %c0_i32_1 = arith.constant 0 : i32
    return %arg0, %c0_i32, %c0_i32_0 : i32, i32, i32
  }
}

</mosaic_0001>

<llo_original>
// kernel: tpu_custom_call.1
$region0: #{tpu_custom_call.1}
  #allocation0 [shape = 'u32[]', space=smem, size = 0x4, offset = 0x4, fixed_abs, tag = 'smem constant byte address 0x4 - core index']
  #allocation1 [shape = 'u32[144,128]{1,0:T(1,128)}', space=vmem, size = 0x12000, scoped, tag = 'internal scratch']
  #allocation2 [shape = 'f32[16,128]{1,0:T(8,128)}', space=vmem, size = 0x2000, scoped, tag = 'scratch operand']
  %s0 = inlined_call_operand.hbm [shape: bf16[16,128], index: 0, kind: input, shape index: {}]
  %s1 = inlined_call_operand.hbm [shape: bf16[16,128], index: 1, kind: input, shape index: {}]
  %s2 = inlined_call_operand.hbm [shape: f32[16,128], index: 2, kind: input, shape index: {}]
  %s3 = inlined_call_operand.hbm [shape: f32[1,1,1], index: 3, kind: output, shape index: {}]
  %s4 = sld [smem:[#allocation0]]
  $region42: #{tpu_custom_call.1} parent=0
    _
  %s6 = ssub.s32 1, %s4
  %s7 = scalar_select 0, %s6, %s4
  $region1: #{tpu_custom_call.1} parent=0
    #allocation3 [shape = 'u8[4096]{0}', space=vmem, size = 0x1000, scoped, tag = 'input window, operand 0, single buffered']
    #allocation4 [shape = 's32[1]{0}', space=sflag, size = 0x4, scoped, tag = 'scoped memory for tpu_custom_call.1']
    #allocation5 [shape = 's32[1]{0}', space=sflag, size = 0x4, scoped, tag = 'scoped memory for tpu_custom_call.1']
    #allocation6 [shape = 'u8[4096]{0}', space=vmem, size = 0x1000, scoped, tag = 'input window, operand 1, single buffered']
    #allocation7 [shape = 's32[1]{0}', space=sflag, size = 0x4, scoped, tag = 'scoped memory for tpu_custom_call.1']
    #allocation8 [shape = 'u8[8192]{0}', space=vmem, size = 0x2000, scoped, tag = 'input window, operand 2, single buffered']
    #allocation9 [shape = 'u8[512]{0}', space=vmem, size = 0x400, scoped, tag = 'output window, operand 0, single buffered']
    %8 = vsyncpa [#allocation4], 0
    %9 = vsyncpa [#allocation7], 0
    %10 = vsyncpa [#allocation5], 0
    // Predicated region
    $region2: #{tpu_custom_call.1} parent=1 // pred_check
      _
    $region3: #{tpu_custom_call.1} parent=1 // pred_check_branch
      %12 = sbr.rel (0) target = $region5
    $region4: #{tpu_custom_call.1} parent=1 // pred_region
      %s13 = sadd.s32 0, 0
      %s15 = ssub.s32 128, 128
      %16 = vsyncadd [#allocation4], %s15
      %s17 = smul.addr %s13, 64
      %s18 = scalar_lea.hbm %s0, %s17
      %s19 = sshll.u32 [#allocation3], 4
      %s20 = int_to_ptr.vmem [resolvable:$true] %s19
      %25 = dma.hbm_to_vmem [thread:$0]  %s18, 128, %s20, [#allocation4], 64, 64, 4
    $region5: #{tpu_custom_call.1} parent=1 // pred_fallthru
      _
    // Predicated region
    $region6: #{tpu_custom_call.1} parent=1 // pred_check
      _
    $region7: #{tpu_custom_call.1} parent=1 // pred_check_branch
      %27 = sbr.rel (0) target = $region9
    $region8: #{tpu_custom_call.1} parent=1 // pred_region
      %s28 = sadd.s32 0, 0
      %s30 = ssub.s32 128, 128
      %31 = vsyncadd [#allocation7], %s30
      %s32 = smul.addr %s28, 64
      %s33 = scalar_lea.hbm %s1, %s32
      %s34 = sshll.u32 [#allocation6], 4
      %s35 = int_to_ptr.vmem [resolvable:$true] %s34
      %40 = dma.hbm_to_vmem [thread:$0]  %s33, 128, %s35, [#allocation7], 64, 64, 4
    $region9: #{tpu_custom_call.1} parent=1 // pred_fallthru
      _
    // Predicated region
    $region10: #{tpu_custom_call.1} parent=1 // pred_check
      _
    $region11: #{tpu_custom_call.1} parent=1 // pred_check_branch
      %42 = sbr.rel (0) target = $region13
    $region12: #{tpu_custom_call.1} parent=1 // pred_region
      %s43 = sadd.s32 0, 0
      %s45 = ssub.s32 256, 256
      %46 = vsyncadd [#allocation7], %s45
      %s47 = smul.addr %s43, 128
      %s48 = scalar_lea.hbm %s2, %s47
      %s49 = sshll.u32 [#allocation8], 4
      %s50 = int_to_ptr.vmem [resolvable:$true] %s49
      %55 = dma.hbm_to_vmem [thread:$0]  %s48, 256, %s50, [#allocation7], 128, 128, 8
    $region13: #{tpu_custom_call.1} parent=1 // pred_fallthru
      _
    // Predicated region
    $region14: #{tpu_custom_call.1} parent=1 // pred_check
      _
    $region15: #{tpu_custom_call.1} parent=1 // pred_check_branch
      %57 = sbr.rel (0) target = $region17
    $region16: #{tpu_custom_call.1} parent=1 // pred_region
      %58 = dma.done [#allocation4], 128
    $region17: #{tpu_custom_call.1} parent=1 // pred_fallthru
      _
    // Predicated region
    $region18: #{tpu_custom_call.1} parent=1 // pred_check
      _
    $region19: #{tpu_custom_call.1} parent=1 // pred_check_branch
      %60 = sbr.rel (0) target = $region21
    $region20: #{tpu_custom_call.1} parent=1 // pred_region
      %61 = dma.done [#allocation7], 128
    $region21: #{tpu_custom_call.1} parent=1 // pred_fallthru
      _
    // Predicated region
    $region22: #{tpu_custom_call.1} parent=1 // pred_check
      _
    $region23: #{tpu_custom_call.1} parent=1 // pred_check_branch
      %63 = sbr.rel (0) target = $region25
    $region24: #{tpu_custom_call.1} parent=1 // pred_region
      %64 = dma.done [#allocation7], 256
    $region25: #{tpu_custom_call.1} parent=1 // pred_fallthru
      _
    %s65 = sadd.s32 0, 0
    %s66 = sadd.s32 0, 0
    %s67 = sadd.s32 0, 0
    %p68 = scmp.eq.s32.totalorder 0, 0
    // Predicated region
    $region26: #{tpu_custom_call.1} parent=1 // pred_check
      %p69 = pneg %p68
    $region27: #{tpu_custom_call.1} parent=1 // pred_check_branch
      %71 = sbr.rel (%p69) target = $region29
    $region28: #{tpu_custom_call.1} parent=1 // pred_region
      %72 = vst [vmem:[#allocation2] sm:$0xff] 0.0
      %73 = vst [vmem:[#allocation2 + $0x8] sm:$0xff] 0.0
    $region29: #{tpu_custom_call.1} parent=1 // pred_fallthru
      _
    %v74 = vld [vmem:[#allocation3] sm:$0xf]
    %v75 = vld [vmem:[#allocation3 + $0x4] sm:$0xf]
    %v76 = vunpack.c.l.bf16 %v74
    %v77 = vunpack.c.l.bf16 %v75
    %v78 = vld [vmem:[#allocation6] sm:$0xf]
    %v79 = vld [vmem:[#allocation6 + $0x4] sm:$0xf]
    %v80 = vunpack.c.l.bf16 %v78
    %v81 = vunpack.c.l.bf16 %v79
    %v82 = vld [vmem:[#allocation8] sm:$0xff]
    %v83 = vld [vmem:[#allocation8 + $0x8] sm:$0xff]
    %v84 = vmul.f32 %v82, %v76
    %v85 = vmul.f32 %v83, %v77
    %v86 = vmul.f32 %v80, 0.5
    %v87 = vmul.f32 %v81, 0.5
    %v88 = vadd.f32 %v76, %v86
    %v89 = vadd.f32 %v77, %v87
    %v90 = vmul.f32 %v88, 1.442695
    %v91 = vpow.pop %v90
    %v92 = vmul.f32 %v89, 1.442695
    %v93 = vpow.pop %v92
    %v94 = vmul.f32 %v91, -0.001
    %v95 = vmul.f32 %v93, -0.001
    %v96 = vadd.f32 %v84, %v94
    %v97 = vadd.f32 %v85, %v95
    %v98 = vadd.f32 %v96, 0.0
    %v99 = vadd.f32 %v97, 0.0
    %v100 = vld [vmem:[#allocation2] sm:$0xff]
    %v101 = vld [vmem:[#allocation2 + $0x8] sm:$0xff]
    %v102 = vadd.f32 %v100, %v98
    %v103 = vadd.f32 %v101, %v99
    %104 = vst [vmem:[#allocation2] sm:$0xff] %v102
    %105 = vst [vmem:[#allocation2 + $0x8] sm:$0xff] %v103
    // Predicated region
    $region30: #{tpu_custom_call.1} parent=1 // pred_check
      %p106 = pneg %p68
    $region31: #{tpu_custom_call.1} parent=1 // pred_check_branch
      %108 = sbr.rel (%p106) target = $region33
    $region32: #{tpu_custom_call.1} parent=1 // pred_region
      %v109 = vld [vmem:[#allocation2] sm:$0xff]
      %v110 = vld [vmem:[#allocation2 + $0x8] sm:$0xff]
      %v111 = vadd.f32 %v109, %v110
      %112 = vadd.xlane.f32.xlu0 %v111
      %v113 = vpop.xlane.xlu0 %112
      %v114 = vrot.slane %v113, 4
      %v115 = vadd.f32 %v113, %v114
      %v116 = vrot.slane %v115, 2
      %v117 = vadd.f32 %v115, %v116
      %v118 = vrot.slane %v117, 1
      %v119 = vadd.f32 %v117, %v118
      %s120 = vtos %v119
      %v121 = vstv %s120
      %vm122 = vcmask 0
      %123 = vst.msk [vmem:[#allocation9] sm:$0x1] %vm122, %v121
    $region33: #{tpu_custom_call.1} parent=1 // pred_fallthru
      _
    // Predicated region
    $region34: #{tpu_custom_call.1} parent=1 // pred_check
      _
    $region35: #{tpu_custom_call.1} parent=1 // pred_check_branch
      %125 = sbr.rel (0) target = $region37
    $region36: #{tpu_custom_call.1} parent=1 // pred_region
      %s127 = ssub.s32 16, 16
      %128 = vsyncadd [#allocation5], %s127
      %s130 = sshll.u32 [#allocation9], 4
      %s131 = int_to_ptr.vmem [resolvable:$true] %s130
      %133 = dma.vmem_to_hbm [thread:$0]  %s131, 16, %s3, [#allocation5]
    $region37: #{tpu_custom_call.1} parent=1 // pred_fallthru
      _
    // Predicated region
    $region38: #{tpu_custom_call.1} parent=1 // pred_check
      _
    $region39: #{tpu_custom_call.1} parent=1 // pred_check_branch
      %135 = sbr.rel (0) target = $region41
    $region40: #{tpu_custom_call.1} parent=1 // pred_region
      %136 = dma.done [#allocation5], 16
    $region41: #{tpu_custom_call.1} parent=1 // pred_fallthru
      _
    %137 = vsyncpa [#allocation4], 1
    %138 = vsyncpa [#allocation7], 1
    %139 = vsyncpa [#allocation5], 1

</llo_original>
